<compile_context>
chip_gen: v7x
topology: tpu7x:2x2x1
jax: 0.10.0
libtpu: 0.0.40
codegen_flags: <defaults>
</compile_context>

<pallas_src>
import functools
import math

import jax
import jax.numpy as jnp
from jax import lax
from jax.experimental import pallas as pl
from jax.experimental.pallas import tpu as pltpu


def _fused_attention_kernel(x_ref, w_ref, b_ref, o_ref,
                            q_cache, k_cache, v_cache, m_sc, l_sc, acc_sc,
                            *, tile, hidden, nk, s_orig, mask_keys,
                            compute_dtype):
    qi = pl.program_id(1)
    ki = pl.program_id(2)
    H = hidden
    cdt = compute_dtype
    f32 = jnp.float32
    bb, s_pad, _ = x_ref.shape

    # ---- once per batch-block: packed QKV projection into resident VMEM caches.
    #      (1/sqrt(H) is already folded into the Q columns of W/b.)
    @pl.when(jnp.logical_and(qi == 0, ki == 0))
    def _project():
        x2d = x_ref[...].astype(cdt).reshape(bb * s_pad, H)
        qkv = jnp.dot(x2d, w_ref[...], preferred_element_type=f32)   # (bb*S, 3H)
        qkv = (qkv.reshape(bb, s_pad, 3 * H) + b_ref[...]).astype(cdt)
        q_cache[...] = qkv[..., :H]
        k_cache[...] = qkv[..., H:2 * H]
        v_cache[...] = qkv[..., 2 * H:]

    q_start = pl.multiple_of(qi * tile, tile)
    k_start = pl.multiple_of(ki * tile, tile)
    q = q_cache[:, pl.ds(q_start, tile), :]                           # (bb, tq, H)
    k = k_cache[:, pl.ds(k_start, tile), :]                           # (bb, tk, H)
    v = v_cache[:, pl.ds(k_start, tile), :]                           # (bb, tk, H)

    # Scores: contract on H without materializing k^T; batched over bb.
    s = lax.dot_general(q, k, (((2,), (2,)), ((0,), (0,))),
                        preferred_element_type=f32)                   # (bb, tq, tk)

    if mask_keys:
        key_idx = k_start + lax.broadcasted_iota(jnp.int32, s.shape, 2)
        s = jnp.where(key_idx < s_orig, s, -jnp.inf)

    if nk == 1:
        # Single kv tile: plain softmax, no online-softmax state round trips.
        m = jnp.max(s, axis=-1, keepdims=True)
        p = jnp.exp(s - m)
        l = jnp.sum(p, axis=-1, keepdims=True)
        ctx = lax.dot_general(p.astype(cdt), v, (((2,), (1,)), ((0,), (0,))),
                              preferred_element_type=f32)
        o_ref[...] = (ctx * pl.reciprocal(l, approx=True)).astype(o_ref.dtype)
    else:
        @pl.when(ki == 0)
        def _reset():
            # -1e30 instead of -inf keeps alpha/p NaN-free even if a whole kv
            # tile is fully masked (only padded tiles at the tail can be).
            m_sc[...] = jnp.full(m_sc.shape, -1e30, f32)
            l_sc[...] = jnp.zeros(l_sc.shape, f32)
            acc_sc[...] = jnp.zeros(acc_sc.shape, f32)

        m_prev = m_sc[...]
        m_new = jnp.maximum(m_prev, jnp.max(s, axis=-1, keepdims=True))
        alpha = jnp.exp(m_prev - m_new)
        p = jnp.exp(s - m_new)
        l_sc[...] = alpha * l_sc[...] + jnp.sum(p, axis=-1, keepdims=True)
        acc_sc[...] = alpha * acc_sc[...] + lax.dot_general(
            p.astype(cdt), v, (((2,), (1,)), ((0,), (0,))),
            preferred_element_type=f32)
        m_sc[...] = m_new

        @pl.when(ki == nk - 1)
        def _finalize():
            inv_l = pl.reciprocal(l_sc[...], approx=True)
            o_ref[...] = (acc_sc[...] * inv_l).astype(o_ref.dtype)


def _round_up(x, m):
    return (x + m - 1) // m * m


def _tile_cap():
    # Generation-aware tile cap: v5e and older prefer 128 (4x128^2 MXU, 1 vst
    # slot); v6e/v7x prefer 256 (2x256^2 MXU).
    try:
        kind = jax.devices()[0].device_kind.lower()
    except Exception:
        return 128
    return 256 if any(g in kind for g in ("v6", "v7")) else 128


def _pick_tiles(s, cap):
    """Return (tile, s_pad): bounded tiles, S padded to a tile multiple."""
    if s <= 128:
        t = _round_up(max(s, 1), 8)
        return t, t
    s_pad = _round_up(s, 128)
    tile = cap if s_pad % cap == 0 else 128
    return tile, s_pad


def _pick_batch_block(batch, s_pad, hidden, cdt_size):
    """Fold a few batch rows into each block to amortize per-grid-step overhead,
    keeping the per-core QKV caches small and >=2 parallel batch groups when
    possible (v7x has 2 TensorCores)."""
    budget = 4 * 1024 * 1024
    best = 1
    for bb in range(1, min(batch, 8) + 1):
        if batch % bb:
            continue
        if bb > 1 and batch >= 2 and batch // bb < 2:
            continue
        if 3 * bb * s_pad * hidden * cdt_size <= budget:
            best = bb
    return best


def _vmem_limit(bb, s_pad, tile, hidden, in_isz, out_isz, c_isz):
    h3 = 3 * hidden
    x_bufs = 2 * bb * s_pad * hidden * in_isz            # double-buffered input block
    w_bufs = 2 * (hidden * h3 * c_isz + h3 * 4)          # resident packed weight/bias
    out_bufs = 2 * bb * tile * hidden * out_isz
    caches = 3 * bb * s_pad * hidden * c_isz             # Q/K/V VMEM caches
    state = bb * tile * hidden * 4 + 2 * bb * tile * 4   # acc + m/l
    temps = bb * s_pad * h3 * 4 + 4 * bb * tile * tile * 4
    need = x_bufs + w_bufs + out_bufs + caches + state + temps
    return int(min(64 * 1024 * 1024, max(8 * 1024 * 1024, 2 * need)))


def attention_forward(gru_out, wq, bq, wk, bk, wv, bv, *, compute_dtype=None):
    """gru_out: (B, S, H); wq/wk/wv: PyTorch-style (out, in) = (H, H); b*: (H,).
    Returns (B, S, 2H) = concat([gru_out, attention_context], axis=-1).

    Accuracy note: MXU operands are bf16 (f32 accumulation) and the softmax
    normalization uses the EUP approximate reciprocal -> ~bf16-level accuracy."""
    B, S, H = gru_out.shape
    dt = gru_out.dtype
    if compute_dtype is None:
        cdt = jnp.bfloat16 if dt == jnp.float32 else dt
    else:
        cdt = compute_dtype

    cap = _tile_cap()
    tile, s_pad = _pick_tiles(S, cap)
    nq = nk = s_pad // tile
    in_isz = jnp.dtype(dt).itemsize
    c_isz = jnp.dtype(cdt).itemsize
    bb = _pick_batch_block(B, s_pad, H, c_isz)
    nb = B // bb

    inv_scale = 1.0 / math.sqrt(H)
    # Packed (H, 3H) weight, pre-transposed to x @ W layout; 1/sqrt(H) folded
    # into the Q columns/bias so the kernel never rescales Q or the scores.
    w_packed = jnp.concatenate([wq.T * inv_scale, wk.T, wv.T], axis=1).astype(cdt)
    b_packed = jnp.concatenate([bq * inv_scale, bk, bv]).reshape(1, 1, 3 * H)
    b_packed = b_packed.astype(jnp.float32)

    x = gru_out
    if s_pad != S:
        x = jnp.pad(x, ((0, 0), (0, s_pad - S), (0, 0)))

    kernel = functools.partial(
        _fused_attention_kernel,
        tile=tile, hidden=H, nk=nk, s_orig=S,
        mask_keys=(s_pad != S), compute_dtype=cdt)

    cost = pl.CostEstimate(
        flops=int(2 * B * s_pad * H * 3 * H + 4 * B * s_pad * s_pad * H),
        transcendentals=int(B * s_pad * s_pad),
        bytes_accessed=int(2 * in_isz * B * s_pad * H
                           + c_isz * 3 * H * H + 4 * 3 * H),
    )

    context = pl.pallas_call(
        kernel,
        out_shape=jax.ShapeDtypeStruct((B, s_pad, H), dt),
        grid_spec=pltpu.PrefetchScalarGridSpec(
            num_scalar_prefetch=0,
            grid=(nb, nq, nk),
            in_specs=[
                # Full (padded) sequence per batch-block; index constant across
                # qi/ki -> DMA'd once per batch-block and kept resident.
                pl.BlockSpec((bb, s_pad, H), lambda bg, qi, ki: (bg, 0, 0)),
                # Packed projection weight / bias: resident constants.
                # TODO(synk): single-buffer these (pl.Buffered(1)) once the
                # top-level pallas_call pipeline honors pipeline_mode.
                pl.BlockSpec((H, 3 * H), lambda bg, qi, ki: (0, 0)),
                pl.BlockSpec((1, 1, 3 * H), lambda bg, qi, ki: (0, 0, 0)),
            ],
            out_specs=pl.BlockSpec((bb, tile, H), lambda bg, qi, ki: (bg, qi, 0)),
            scratch_shapes=[
                pltpu.VMEM((bb, s_pad, H), cdt),          # Q cache (scale folded)
                pltpu.VMEM((bb, s_pad, H), cdt),          # K cache
                pltpu.VMEM((bb, s_pad, H), cdt),          # V cache
                # TODO(synk): m/l at lane-width 1 waste 127/128 lanes; could be
                # fused as columns of one (bb, tile, 128) scratch.
                pltpu.VMEM((bb, tile, 1), jnp.float32),   # running max m
                pltpu.VMEM((bb, tile, 1), jnp.float32),   # running sum l
                pltpu.VMEM((bb, tile, H), jnp.float32),   # un-normalized context
            ],
        ),
        compiler_params=pltpu.CompilerParams(
            # Q/K/V caches are filled at (qi==0, ki==0) per batch-block, so the
            # qi axis must stay on one core; only the batch axis is parallel.
            dimension_semantics=("parallel", "arbitrary", "arbitrary"),
            vmem_limit_bytes=_vmem_limit(bb, s_pad, tile, H, in_isz, in_isz,
                                         c_isz),
        ),
        cost_estimate=cost,
    )(x, w_packed, b_packed)

    if s_pad != S:
        context = context[:, :S, :]
    # TODO(synk): for production H < 128, emit (tq, Bb*H) lane-dense slabs and
    # un-transpose in the wrapper to avoid masked vst on the writeback.
    # Cheap concat in the wrapper keeps the kernel writeback at half the bytes.
    return jnp.concatenate([gru_out, context], axis=-1)


def attention_reference(gru_out, wq, bq, wk, bk, wv, bv):
    """Pure-JAX reference mirroring the PyTorch-style attention forward."""
    H = gru_out.shape[-1]
    Q = gru_out @ wq.T + bq
    K = gru_out @ wk.T + bk
    V = gru_out @ wv.T + bv
    scores = jnp.einsum("bsh,bth->bst", Q, K) / (H ** 0.5)
    attn = jax.nn.softmax(scores, axis=-1)
    context = jnp.einsum("bst,bth->bsh", attn, V)
    return jnp.concatenate([gru_out, context], axis=-1)


def _run_case(B, S, H, seed, tol):
    key = jax.random.PRNGKey(seed)
    k_x, k_wq, k_bq, k_wk, k_bk, k_wv, k_bv = jax.random.split(key, 7)
    gru_out = jax.random.normal(k_x, (B, S, H), dtype=jnp.float32)
    lim = 1.0 / (H ** 0.5)
    wq = jax.random.uniform(k_wq, (H, H), jnp.float32, -lim, lim)
    bq = jax.random.uniform(k_bq, (H,), jnp.float32, -lim, lim)
    wk = jax.random.uniform(k_wk, (H, H), jnp.float32, -lim, lim)
    bk = jax.random.uniform(k_bk, (H,), jnp.float32, -lim, lim)
    wv = jax.random.uniform(k_wv, (H, H), jnp.float32, -lim, lim)
    bv = jax.random.uniform(k_bv, (H,), jnp.float32, -lim, lim)

    out = attention_forward(gru_out, wq, bq, wk, bk, wv, bv)
    out = jax.block_until_ready(out)

    ref = attention_reference(gru_out, wq, bq, wk, bk, wv, bv)
    assert out.shape == (B, S, 2 * H), out.shape
    max_err = float(jnp.max(jnp.abs(out - ref)))
    # bf16 MXU operands + approx reciprocal -> ~bf16-level accuracy.
    assert max_err < tol, (B, S, H, max_err)


if __name__ == "__main__":
    # Small shapes consistent with the module (batch=2, seq=8, hidden=32):
    # exercises the single-kv-tile fast path.
    _run_case(2, 8, 32, seed=0, tol=3e-2)
    # KGML-like ragged sequence: exercises S padding + key masking + the
    # multi-kv-tile online-softmax path (tile=128, s_pad=384).
    _run_case(2, 300, 32, seed=1, tol=3e-2)
    print("KERNEL_OK")
</pallas_src>

<mosaic_0001>
module attributes {stable_mosaic.version = 11 : i64} {
  func.func @_fused_attention_kernel(%arg0: i32, %arg1: i32, %arg2: i32, %arg3: memref<1x8x32xf32, #tpu.memory_space<vmem>>, %arg4: memref<32x96xbf16, #tpu.memory_space<vmem>>, %arg5: memref<1x1x96xf32, #tpu.memory_space<vmem>>, %arg6: memref<1x8x32xf32, #tpu.memory_space<vmem>>, %arg7: memref<1x8x32xbf16, #tpu.memory_space<vmem>>, %arg8: memref<1x8x32xbf16, #tpu.memory_space<vmem>>, %arg9: memref<1x8x32xbf16, #tpu.memory_space<vmem>>, %arg10: memref<1x8x1xf32, #tpu.memory_space<vmem>>, %arg11: memref<1x8x1xf32, #tpu.memory_space<vmem>>, %arg12: memref<1x8x32xf32, #tpu.memory_space<vmem>>) attributes {dimension_semantics = [#tpu.dimension_semantics<parallel>, #tpu.dimension_semantics<arbitrary>, #tpu.dimension_semantics<arbitrary>], iteration_bounds = array<i64: 2, 1, 1>, scalar_prefetch = 0 : i64, scratch_operands = 6 : i64, tpu.core_type = #tpu.core_type<tc>, window_params = [{transform_indices = @transform_0, window_bounds = array<i64: 1, 8, 32>}, {pipeline_mode = #tpu.pipeline_mode<synchronous>, transform_indices = @transform_1, window_bounds = array<i64: 32, 96>}, {pipeline_mode = #tpu.pipeline_mode<synchronous>, transform_indices = @transform_2, window_bounds = array<i64: 1, 1, 96>}, {transform_indices = @transform_3, window_bounds = array<i64: 1, 8, 32>}]} {
    %c0_i32 = arith.constant 0 : i32
    %0 = arith.cmpi eq, %arg1, %c0_i32 : i32
    %c0_i32_0 = arith.constant 0 : i32
    %1 = arith.cmpi eq, %arg2, %c0_i32_0 : i32
    %2 = arith.andi %0, %1 : i1
    %3 = arith.extui %2 : i1 to i32
    %c0_i32_1 = arith.constant 0 : i32
    %4 = arith.cmpi ne, %3, %c0_i32_1 : i32
    scf.if %4 {
      %c0_14 = arith.constant 0 : index
      %c0_15 = arith.constant 0 : index
      %c0_16 = arith.constant 0 : index
      %29 = vector.load %arg3[%c0_14, %c0_15, %c0_16] : memref<1x8x32xf32, #tpu.memory_space<vmem>>, vector<1x8x32xf32>
      %30 = arith.truncf %29 : vector<1x8x32xf32> to vector<1x8x32xbf16>
      %31 = vector.shape_cast %30 : vector<1x8x32xbf16> to vector<8x32xbf16>
      %c0_17 = arith.constant 0 : index
      %c0_18 = arith.constant 0 : index
      %32 = vector.load %arg4[%c0_17, %c0_18] : memref<32x96xbf16, #tpu.memory_space<vmem>>, vector<32x96xbf16>
      %cst_19 = arith.constant dense<0.000000e+00> : vector<8x96xf32>
      %33 = tpu.matmul %31, %32, %cst_19 {dimension_numbers = #tpu.dot_dimension_numbers<[1], [0], [0], [1], [0, 0, 1, 1], [], []>} : vector<8x32xbf16>, vector<32x96xbf16>, vector<8x96xf32> -> vector<8x96xf32>
      %34 = vector.shape_cast %33 : vector<8x96xf32> to vector<1x8x96xf32>
      %c0_20 = arith.constant 0 : index
      %c0_21 = arith.constant 0 : index
      %c0_22 = arith.constant 0 : index
      %35 = vector.load %arg5[%c0_20, %c0_21, %c0_22] : memref<1x1x96xf32, #tpu.memory_space<vmem>>, vector<1x1x96xf32>
      %36 = vector.broadcast %35 : vector<1x1x96xf32> to vector<1x8x96xf32>
      %37 = arith.addf %34, %36 : vector<1x8x96xf32>
      %38 = arith.truncf %37 : vector<1x8x96xf32> to vector<1x8x96xbf16>
      %39 = vector.extract_strided_slice %38 {offsets = [0, 0, 0], sizes = [1, 8, 32], strides = [1, 1, 1]} : vector<1x8x96xbf16> to vector<1x8x32xbf16>
      %c0_23 = arith.constant 0 : index
      %c0_24 = arith.constant 0 : index
      %c0_25 = arith.constant 0 : index
      %40 = vector.load %arg7[%c0_23, %c0_24, %c0_25] : memref<1x8x32xbf16, #tpu.memory_space<vmem>>, vector<1x8x32xbf16>
      tpu.vector_store %arg7[%c0_23, %c0_24, %c0_25], %39 {strides = array<i32>} : memref<1x8x32xbf16, #tpu.memory_space<vmem>>, vector<1x8x32xbf16>,
      %41 = vector.extract_strided_slice %38 {offsets = [0, 0, 32], sizes = [1, 8, 32], strides = [1, 1, 1]} : vector<1x8x96xbf16> to vector<1x8x32xbf16>
      %c0_26 = arith.constant 0 : index
      %c0_27 = arith.constant 0 : index
      %c0_28 = arith.constant 0 : index
      %42 = vector.load %arg8[%c0_26, %c0_27, %c0_28] : memref<1x8x32xbf16, #tpu.memory_space<vmem>>, vector<1x8x32xbf16>
      tpu.vector_store %arg8[%c0_26, %c0_27, %c0_28], %41 {strides = array<i32>} : memref<1x8x32xbf16, #tpu.memory_space<vmem>>, vector<1x8x32xbf16>,
      %43 = vector.extract_strided_slice %38 {offsets = [0, 0, 64], sizes = [1, 8, 32], strides = [1, 1, 1]} : vector<1x8x96xbf16> to vector<1x8x32xbf16>
      %c0_29 = arith.constant 0 : index
      %c0_30 = arith.constant 0 : index
      %c0_31 = arith.constant 0 : index
      %44 = vector.load %arg9[%c0_29, %c0_30, %c0_31] : memref<1x8x32xbf16, #tpu.memory_space<vmem>>, vector<1x8x32xbf16>
      tpu.vector_store %arg9[%c0_29, %c0_30, %c0_31], %43 {strides = array<i32>} : memref<1x8x32xbf16, #tpu.memory_space<vmem>>, vector<1x8x32xbf16>,
    } else {
    }
    %c8_i32 = arith.constant 8 : i32
    %5 = arith.muli %arg1, %c8_i32 : i32
    %6 = tpu.assume_multiple %5, 8 : i32
    %c8_i32_2 = arith.constant 8 : i32
    %7 = arith.muli %arg2, %c8_i32_2 : i32
    %8 = tpu.assume_multiple %7, 8 : i32
    %c0 = arith.constant 0 : index
    %9 = arith.index_cast %6 : i32 to index
    %c0_3 = arith.constant 0 : index
    %10 = vector.load %arg7[%c0, %9, %c0_3] : memref<1x8x32xbf16, #tpu.memory_space<vmem>>, vector<1x8x32xbf16>
    %c0_4 = arith.constant 0 : index
    %11 = arith.index_cast %8 : i32 to index
    %c0_5 = arith.constant 0 : index
    %12 = vector.load %arg8[%c0_4, %11, %c0_5] : memref<1x8x32xbf16, #tpu.memory_space<vmem>>, vector<1x8x32xbf16>
    %c0_6 = arith.constant 0 : index
    %13 = arith.index_cast %8 : i32 to index
    %c0_7 = arith.constant 0 : index
    %14 = vector.load %arg9[%c0_6, %13, %c0_7] : memref<1x8x32xbf16, #tpu.memory_space<vmem>>, vector<1x8x32xbf16>
    %cst = arith.constant dense<0.000000e+00> : vector<1x8x8xf32>
    %15 = tpu.matmul %10, %12, %cst {dimension_numbers = #tpu.dot_dimension_numbers<[2], [2], [1], [1], [0, 0, 0, 1, 1, 1], [0], [0]>} : vector<1x8x32xbf16>, vector<1x8x32xbf16>, vector<1x8x8xf32> -> vector<1x8x8xf32>
    %cst_8 = arith.constant dense<0xFF800000> : vector<1x8xf32>
    %16 = vector.multi_reduction <maximumf>, %15, %cst_8 [2] : vector<1x8x8xf32> to vector<1x8xf32>
    %17 = vector.shape_cast %16 : vector<1x8xf32> to vector<1x8x1xf32>
    %18 = vector.broadcast %17 : vector<1x8x1xf32> to vector<1x8x8xf32>
    %19 = arith.subf %15, %18 : vector<1x8x8xf32>
    %20 = math.exp %19 : vector<1x8x8xf32>
    %cst_9 = arith.constant dense<0.000000e+00> : vector<1x8xf32>
    %21 = vector.multi_reduction <add>, %20, %cst_9 [2] : vector<1x8x8xf32> to vector<1x8xf32>
    %22 = vector.shape_cast %21 : vector<1x8xf32> to vector<1x8x1xf32>
    %23 = arith.truncf %20 : vector<1x8x8xf32> to vector<1x8x8xbf16>
    %cst_10 = arith.constant dense<0.000000e+00> : vector<1x8x32xf32>
    %24 = tpu.matmul %23, %14, %cst_10 {dimension_numbers = #tpu.dot_dimension_numbers<[2], [1], [1], [2], [0, 0, 0, 1, 1, 2], [0], [0]>} : vector<1x8x8xbf16>, vector<1x8x32xbf16>, vector<1x8x32xf32> -> vector<1x8x32xf32>
    %25 = tpu.reciprocal %22 {approx = true} : vector<1x8x1xf32> -> vector<1x8x1xf32>
    %26 = vector.broadcast %25 : vector<1x8x1xf32> to vector<1x8x32xf32>
    %27 = arith.mulf %24, %26 : vector<1x8x32xf32>
    %c0_11 = arith.constant 0 : index
    %c0_12 = arith.constant 0 : index
    %c0_13 = arith.constant 0 : index
    %28 = vector.load %arg6[%c0_11, %c0_12, %c0_13] : memref<1x8x32xf32, #tpu.memory_space<vmem>>, vector<1x8x32xf32>
    tpu.vector_store %arg6[%c0_11, %c0_12, %c0_13], %27 {strides = array<i32>} : memref<1x8x32xf32, #tpu.memory_space<vmem>>, vector<1x8x32xf32>,
    return
  }
  func.func @transform_0(%arg0: i32, %arg1: i32, %arg2: i32) -> (i32, i32, i32) {
    %c0_i32 = arith.constant 0 : i32
    %c0_i32_0 = arith.constant 0 : i32
    %c0_i32_1 = arith.constant 0 : i32
    return %arg0, %c0_i32, %c0_i32_0 : i32, i32, i32
  }
  func.func @transform_1(%arg0: i32, %arg1: i32, %arg2: i32) -> (i32, i32) {
    %c0_i32 = arith.constant 0 : i32
    %c0_i32_0 = arith.constant 0 : i32
    %c0_i32_1 = arith.constant 0 : i32
    return %c0_i32, %c0_i32_0 : i32, i32
  }
  func.func @transform_2(%arg0: i32, %arg1: i32, %arg2: i32) -> (i32, i32, i32) {
    %c0_i32 = arith.constant 0 : i32
    %c0_i32_0 = arith.constant 0 : i32
    %c0_i32_1 = arith.constant 0 : i32
    %c0_i32_2 = arith.constant 0 : i32
    return %c0_i32, %c0_i32_0, %c0_i32_1 : i32, i32, i32
  }
  func.func @transform_3(%arg0: i32, %arg1: i32, %arg2: i32) -> (i32, i32, i32) {
    %c0_i32 = arith.constant 0 : i32
    %c0_i32_0 = arith.constant 0 : i32
    return %arg0, %arg1, %c0_i32 : i32, i32, i32
  }
}

</mosaic_0001>

<llo_original>
// kernel: tpu_custom_call.1
$region0: #{tpu_custom_call.1}
  #allocation0 [shape = 'u32[]', space=smem, size = 0x4, offset = 0x4, fixed_abs, tag = 'smem constant byte address 0x4 - core index']
  #allocation1 [shape = 'u32[144,128]{1,0:T(1,128)}', space=vmem, size = 0x12000, scoped, tag = 'internal scratch']
  #allocation2 [shape = 'bf16[1,8,32]{2,1,0:T(8,128)(2,1)}', space=vmem, size = 0x800, scoped, tag = 'scratch operand']
  #allocation3 [shape = 'bf16[1,8,32]{2,1,0:T(8,128)(2,1)}', space=vmem, size = 0x800, scoped, tag = 'scratch operand']
  #allocation4 [shape = 'bf16[1,8,32]{2,1,0:T(8,128)(2,1)}', space=vmem, size = 0x800, scoped, tag = 'scratch operand']
  #allocation5 [shape = 'f32[1,8,1]{2,1,0:T(8,128)}', space=vmem, size = 0x1000, scoped, tag = 'scratch operand']
  #allocation6 [shape = 'f32[1,8,1]{2,1,0:T(8,128)}', space=vmem, size = 0x1000, scoped, tag = 'scratch operand']
  #allocation7 [shape = 'f32[1,8,32]{2,1,0:T(8,128)}', space=vmem, size = 0x1000, scoped, tag = 'scratch operand']
  %s0 = inlined_call_operand.hbm [shape: f32[2,8,32], index: 0, kind: input, shape index: {}]
  %s1 = inlined_call_operand.hbm [shape: bf16[32,96], index: 1, kind: input, shape index: {}]
  %s2 = inlined_call_operand.vmem [shape: f32[1,1,96], index: 2, kind: input, shape index: {}]
  %s3 = inlined_call_operand.hbm [shape: f32[2,8,32], index: 3, kind: output, shape index: {}]
  %s4 = sld [smem:[#allocation0]]
  $region57: #{tpu_custom_call.1} parent=0
    _
  %s6 = ssub.s32 1, %s4
  %s7 = scalar_select 0, %s6, %s4
  $region1: #{tpu_custom_call.1} parent=0
    #allocation8 [shape = 'u8[8192]{0}', space=vmem, size = 0x2000, scoped, tag = 'input window, operand 0']
    #allocation9 [shape = 's32[2]{0}', space=sflag, size = 0x8, scoped, tag = 'scoped memory for tpu_custom_call.1']
    #allocation10 [shape = 's32[2]{0}', space=sflag, size = 0x8, scoped, tag = 'scoped memory for tpu_custom_call.1']
    #allocation11 [shape = 'u8[8192]{0}', space=vmem, size = 0x2000, scoped, tag = 'input window, operand 1, single buffered']
    #allocation12 [shape = 's32[1]{0}', space=sflag, size = 0x4, scoped, tag = 'scoped memory for tpu_custom_call.1']
    #allocation13 [shape = 'u8[8192]{0}', space=vmem, size = 0x2000, scoped, tag = 'output window, operand 0']
    %8 = vsyncpa [#allocation9], 0
    %s9 = scalar_lea.sflag [#allocation9], 1
    %10 = vsyncpa %s9, 0
    %11 = vsyncpa [#allocation12], 0
    %12 = vsyncpa [#allocation10], 0
    %s13 = scalar_lea.sflag [#allocation10], 1
    %14 = vsyncpa %s13, 0
    loop: start=0, step=1, limit=4
    $region2: #{tpu_custom_call.1} parent=1 // loop_pre_header
      _
    $region3: #{tpu_custom_call.1} parent=1 // loop_header
      %s16 = sphi 0, %s20
      %p17 = scmp.ge.s32.totalorder %s16, 4
      %s23 = sphi 0, %s42
      %s24 = sphi 0, %s38
      %s25 = sphi 0, %s34
      %s26 = sphi 0, %s23
      %s27 = sphi 0, %s24
      %s28 = sphi 0, %s25
      %s29 = sphi 0, %s26
      %s30 = sphi 0, %s27
      %s31 = sphi 0, %s28
      %s45 = sphi 0, %s47
      %s48 = sphi 0, %s45
      %s49 = sphi 0, %s48
      %s65 = sphi 0, %s49
      %s69 = sphi 0, %s69
      %s71 = sphi 0, %s69
      %s72 = sphi 0, %s71
      %s86 = sphi 0, %s72
      %s90 = sphi 0, %s90
      %s92 = sphi 0, %s90
      %s93 = sphi 0, %s92
      %s107 = sphi 0, %s93
      %s115 = sphi 0, %s117
      %s118 = sphi 0, %s115
      %s119 = sphi 0, %s118
      %s135 = sphi 0, %s119
    $region4: #{tpu_custom_call.1} parent=1 // loop_header_branch
      %19 = sbr.rel (%p17) target = $region8
    $region5: #{tpu_custom_call.1} parent=1 // loop_body
      %s21 = ssub.s32 %s16, 1
      %s22 = ssub.s32 %s16, 2
      %s32 = sadd.s32 1, %s25
      %p33 = scmp.ge.s32.totalorder %s32, 1
      %s34 = scalar_select %p33, 0, %s32
      %s35 = sadd.s32 1, %s24
      %s36 = scalar_select %p33, %s35, %s24
      %p37 = scmp.ge.s32.totalorder %s36, 1
      %s38 = scalar_select %p37, 0, %s36
      %s39 = sadd.s32 1, %s23
      %s40 = scalar_select %p37, %s39, %s23
      %p41 = scmp.ge.s32.totalorder %s40, 2
      %s42 = scalar_select %p41, 0, %s40
      %s43 = ssub.s32 %s23, %s42
      %p44 = scmp.eq.s32.totalorder %s43, 0
      %s46 = sadd.s32 %s45, 1
      %s47 = scalar_select %p44, %s45, %s46
      %p50 = pneg %p44
      %p51 = scmp.eq.s32.totalorder %s16, 1
      %p52 = por %p50, %p51
      %p53 = scmp.ne.s32.totalorder %s45, %s48
      %p54 = scmp.eq.s32.totalorder %s16, 0
      %p55 = por %p53, %p54
      %p56 = scmp.ne.s32.totalorder %s45, %s48
      %p57 = scmp.eq.s32.totalorder %s21, 1
      %p58 = por %p56, %p57
      %p59 = scmp.ne.s32.totalorder %s48, %s49
      %p60 = scmp.eq.s32.totalorder %s21, 0
      %p61 = por %p59, %p60
      %p62 = scmp.ne.s32.totalorder %s48, %s49
      %p63 = scmp.eq.s32.totalorder %s22, 1
      %p64 = por %p62, %p63
      %p66 = scmp.ne.s32.totalorder %s49, %s65
      %p67 = scmp.eq.s32.totalorder %s22, 0
      %p68 = por %p66, %p67
      %s70 = sadd.s32 %s69, 1
      %p73 = scmp.eq.s32.totalorder %s16, 1
      %p74 = scmp.ne.s32.totalorder %s69, %s71
      %p75 = scmp.eq.s32.totalorder %s16, 0
      %p76 = por %p74, %p75
      %p77 = scmp.ne.s32.totalorder %s69, %s71
      %p78 = scmp.eq.s32.totalorder %s21, 1
      %p79 = por %p77, %p78
      %p80 = scmp.ne.s32.totalorder %s71, %s72
      %p81 = scmp.eq.s32.totalorder %s21, 0
      %p82 = por %p80, %p81
      %p83 = scmp.ne.s32.totalorder %s71, %s72
      %p84 = scmp.eq.s32.totalorder %s22, 1
      %p85 = por %p83, %p84
      %p87 = scmp.ne.s32.totalorder %s72, %s86
      %p88 = scmp.eq.s32.totalorder %s22, 0
      %p89 = por %p87, %p88
      %s91 = sadd.s32 %s90, 1
      %p94 = scmp.eq.s32.totalorder %s16, 1
      %p95 = scmp.ne.s32.totalorder %s90, %s92
      %p96 = scmp.eq.s32.totalorder %s16, 0
      %p97 = por %p95, %p96
      %p98 = scmp.ne.s32.totalorder %s90, %s92
      %p99 = scmp.eq.s32.totalorder %s21, 1
      %p100 = por %p98, %p99
      %p101 = scmp.ne.s32.totalorder %s92, %s93
      %p102 = scmp.eq.s32.totalorder %s21, 0
      %p103 = por %p101, %p102
      %p104 = scmp.ne.s32.totalorder %s92, %s93
      %p105 = scmp.eq.s32.totalorder %s22, 1
      %p106 = por %p104, %p105
      %p108 = scmp.ne.s32.totalorder %s93, %s107
      %p109 = scmp.eq.s32.totalorder %s22, 0
      %p110 = por %p108, %p109
      %s111 = ssub.s32 %s23, %s42
      %s112 = ssub.s32 %s24, %s38
      %s113 = sor.u32 %s111, %s112
      %p114 = scmp.eq.s32.totalorder %s113, 0
      %s116 = sadd.s32 %s115, 1
      %s117 = scalar_select %p114, %s115, %s116
      %p120 = pneg %p114
      %p121 = scmp.eq.s32.totalorder %s16, 1
      %p122 = por %p120, %p121
      %p123 = scmp.ne.s32.totalorder %s115, %s118
      %p124 = scmp.eq.s32.totalorder %s16, 0
      %p125 = por %p123, %p124
      %p126 = scmp.ne.s32.totalorder %s115, %s118
      %p127 = scmp.eq.s32.totalorder %s21, 1
      %p128 = por %p126, %p127
      %p129 = scmp.ne.s32.totalorder %s118, %s119
      %p130 = scmp.eq.s32.totalorder %s21, 0
      %p131 = por %p129, %p130
      %p132 = scmp.ne.s32.totalorder %s118, %s119
      %p133 = scmp.eq.s32.totalorder %s22, 1
      %p134 = por %p132, %p133
      %p136 = scmp.ne.s32.totalorder %s119, %s135
      %p137 = scmp.eq.s32.totalorder %s22, 0
      %p138 = por %p136, %p137
      %p139 = scmp.le.s32.totalorder 1, %s16
      %p140 = scmp.lt.s32.totalorder %s16, 3
      %p141 = pnand %p139, %p140
      %p142 = pneg %p141
      // Predicated region
      $region9: #{tpu_custom_call.1} parent=5 // pred_check
        _
      $region10: #{tpu_custom_call.1} parent=5 // pred_check_branch
        %144 = sbr.rel (%p141) target = $region12
      $region11: #{tpu_custom_call.1} parent=5 // pred_region
        %s145 = ssub.s32 %s16, 1
        // Predicated region
        $region13: #{tpu_custom_call.1} parent=11 // pred_check
          %p146 = pneg %p82
        $region14: #{tpu_custom_call.1} parent=11 // pred_check_branch
          %148 = sbr.rel (%p146) target = $region16
        $region15: #{tpu_custom_call.1} parent=11 // pred_region
          %s150 = ssub.s32 256, 256
          %151 = vsyncadd [#allocation12], %s150
          %s152 = sshll.u32 [#allocation11], 4
          %s153 = int_to_ptr.vmem [resolvable:$true] %s152
          %158 = dma.hbm_to_vmem [thread:$0]  %s1, 256, %s153, [#allocation12], 64, 64, 4
        $region16: #{tpu_custom_call.1} parent=11 // pred_fallthru
          _
        // Predicated region
        $region17: #{tpu_custom_call.1} parent=11 // pred_check
          %p159 = pneg %p103
        $region18: #{tpu_custom_call.1} parent=11 // pred_check_branch
          %161 = sbr.rel (%p159) target = $region20
        $region19: #{tpu_custom_call.1} parent=11 // pred_region
          _
        $region20: #{tpu_custom_call.1} parent=11 // pred_fallthru
          _
      $region12: #{tpu_custom_call.1} parent=5 // pred_fallthru
        _
      %p162 = scmp.lt.s32.totalorder %s16, 2
      // Predicated region
      $region21: #{tpu_custom_call.1} parent=5 // pred_check
        %p163 = pneg %p162
      $region22: #{tpu_custom_call.1} parent=5 // pred_check_branch
        %165 = sbr.rel (%p163) target = $region24
      $region23: #{tpu_custom_call.1} parent=5 // pred_region
        // Predicated region
        $region25: #{tpu_custom_call.1} parent=23 // pred_check
          %p166 = pneg %p55
        $region26: #{tpu_custom_call.1} parent=23 // pred_check_branch
          %168 = sbr.rel (%p166) target = $region28
        $region27: #{tpu_custom_call.1} parent=23 // pred_region
          %s169 = sand.u32 %s45, 1
          %s170 = scalar_lea.sflag [#allocation9], %s169
          %s171 = sand.u32 %s45, 1
          %s172 = smul.addr %s171, 8
          %s173 = scalar_lea.vmem [#allocation8], %s172
          %s175 = ssub.s32 128, 128
          %176 = vsyncadd %s170, %s175
          %s177 = smul.addr %s23, 128
          %s178 = scalar_lea.hbm %s0, %s177
          %s180 = sshll.u32 %s173, 4
          %s181 = int_to_ptr.vmem [resolvable:$true] %s180
          %183 = dma.hbm_to_vmem [thread:$0]  %s178, 128, %s181, %s170
        $region28: #{tpu_custom_call.1} parent=23 // pred_fallthru
          _
      $region24: #{tpu_custom_call.1} parent=5 // pred_fallthru
        _
      %p184 = scmp.le.s32.totalorder 1, %s16
      %p185 = scmp.lt.s32.totalorder %s16, 3
      %p186 = pnand %p184, %p185
      %p187 = pneg %p186
      // Predicated region
      $region29: #{tpu_custom_call.1} parent=5 // pred_check
        _
      $region30: #{tpu_custom_call.1} parent=5 // pred_check_branch
        %189 = sbr.rel (%p186) target = $region32
      $region31: #{tpu_custom_call.1} parent=5 // pred_region
        %s190 = ssub.s32 %s16, 1
        %s191 = sand.u32 %s48, 1
        %s192 = scalar_lea.sflag [#allocation9], %s191
        %s193 = sand.u32 %s48, 1
        %s194 = smul.addr %s193, 8
        %s195 = scalar_lea.vmem [#allocation8], %s194
        // Predicated region
        $region33: #{tpu_custom_call.1} parent=31 // pred_check
          %p196 = pneg %p61
        $region34: #{tpu_custom_call.1} parent=31 // pred_check_branch
          %198 = sbr.rel (%p196) target = $region36
        $region35: #{tpu_custom_call.1} parent=31 // pred_region
          %199 = dma.done %s192, 128
        $region36: #{tpu_custom_call.1} parent=31 // pred_fallthru
          _
        // Predicated region
        $region37: #{tpu_custom_call.1} parent=31 // pred_check
          %p200 = pneg %p82
        $region38: #{tpu_custom_call.1} parent=31 // pred_check_branch
          %202 = sbr.rel (%p200) target = $region40
        $region39: #{tpu_custom_call.1} parent=31 // pred_region
          %203 = dma.done [#allocation12], 256
        $region40: #{tpu_custom_call.1} parent=31 // pred_fallthru
          _
        %s204 = sand.u32 %s48, 1
        %s205 = scalar_lea.sflag [#allocation9], %s204
        %s206 = sand.u32 %s48, 1
        %s207 = smul.addr %s206, 8
        %s208 = scalar_lea.vmem [#allocation8], %s207
        %p209 = pneg %p61
        %p210 = pneg %p58
        %p211 = pneg %p82
        %p212 = pneg %p79
        %p213 = pneg %p103
        %p214 = pneg %p100
        %p215 = pneg %p131
        %p216 = pneg %p128
        %s217 = sand.u32 %s118, 1
        %s218 = scalar_lea.sflag [#allocation10], %s217
        %s219 = sand.u32 %s118, 1
        %s220 = smul.addr %s219, 8
        %s221 = scalar_lea.vmem [#allocation13], %s220
        %p223 = scmp.eq.s32.totalorder %s27, 0
        %p224 = scmp.eq.s32.totalorder %s28, 0
        %p225 = pnand %p223, %p224
        %p226 = pneg %p225
        // Predicated region
        $region41: #{tpu_custom_call.1} parent=31 // pred_check
          _
        $region42: #{tpu_custom_call.1} parent=31 // pred_check_branch
          %228 = sbr.rel (%p225) target = $region44
        $region43: #{tpu_custom_call.1} parent=31 // pred_region
          %v229 = vld [vmem:[%s195] sm:$0xff]
          %v230 = vpack.c.bf16 %v229, %v229
          %v231 = vld [vmem:[#allocation11] sm:$0xf]
          %v232 = vld [vmem:[#allocation11 + $0x4] sm:$0xf]
          %v233 = vld [vmem:[#allocation11 + $0x8] sm:$0xf]
          %v234 = vld [vmem:[#allocation11 + $0xc] sm:$0xf]
          %v239 = vunpack.c.l.b16 %v231
          %v240 = vunpack.c.l.b16 %v232
          %v241 = vunpack.c.l.b16 %v233
          %v242 = vunpack.c.l.b16 %v234
          %v243 = vpack.c.b16 %v240, %v239
          %v244 = vpack.c.b16 %v242, %v241
          %vm247 = vcmask 261120
          %v249 = vsel %vm247, %v230, 0
          %251 = vmatprep.subr.bf16.mxu0 0
          %252 = vmatpush1.bf16.msra.mxu0 %v243
          %253 = vmatprep.subr.bf16.mxu0 0
          %254 = vmatpush1.bf16.msra.mxu0 %v244
          %255 = vmatprep.subr.bf16.mxu0 0
          %256 = vmatpush1.bf16.msra.mxu0 0
          %257 = vmatprep.subr.bf16.mxu0 0
          %258 = vmatpush1.bf16.msra.mxu0 0
          %259 = vmatprep.subr.bf16.mxu0 0
          %260 = vmatpush1.bf16.msra.mxu0 0
          %261 = vmatprep.subr.bf16.mxu0 0
          %262 = vmatpush1.bf16.msra.mxu0 0
          %263 = vmatprep.subr.bf16.mxu0 0
          %264 = vmatpush1.bf16.msra.mxu0 0
          %265 = vmatprep.subr.bf16.mxu0 0
          %266 = vmatpush1.bf16.msra.mxu0 0
          %267 = vmatprep.subr.bf16.mxu0 0
          %268 = vmatpush1.bf16.msra.mxu0 0
          %269 = vmatprep.subr.bf16.mxu0 0
          %270 = vmatpush1.bf16.msra.mxu0 0
          %271 = vmatprep.subr.bf16.mxu0 0
          %272 = vmatpush1.bf16.msra.mxu0 0
          %273 = vmatprep.subr.bf16.mxu0 0
          %274 = vmatpush1.bf16.msra.mxu0 0
          %275 = vmatprep.subr.bf16.mxu0 0
          %276 = vmatpush1.bf16.msra.mxu0 0
          %277 = vmatprep.subr.bf16.mxu0 0
          %278 = vmatpush1.bf16.msra.mxu0 0
          %279 = vmatprep.subr.bf16.mxu0 0
          %280 = vmatpush1.bf16.msra.mxu0 0
          %281 = vmatprep.subr.bf16.mxu0 0
          %282 = vmatpush1.bf16.msra.mxu0 0
          %283 = vmatprep.mubr.bf16.mxu0 0
          %284 = vmatmul.mubr.bf16.gmra.mrb[0].mxu0 %v249
          %v285 = vpop.f32.mrb[0].mxu0
          %v286 = vadd.f32 0.0, %v285
          %v287 = vpop.f32.mrb[0].mxu0
          %v288 = vpop.f32.mrb[0].mxu0
          %v289 = vpop.f32.mrb[0].mxu0
          %290 = vdwg.mxu0
          %v291 = vld [vmem:[%s2] sm:$0x1]
          %v293 = vlaneseq
          %v294 = vshrl.u32 %v293, 7
          %v295 = vsub.s32 0, %v294
          %v296 = vrot.slane %v291, %v295
          %v298 = vadd.f32 %v286, %v296
          %v299 = vpack.c.bf16 %v298, %v298
          %vm300 = vcmask 257024
          %301 = vst.msk [vmem:[#allocation2] sm:$0xf] %vm300, %v299
          %v303 = vunpack.c.l.b16 %v299
          %v304 = vpack.c.b16 %v303, %v303
          %305 = vrot.lane.b32.xlu0 %v304, 96
          %v306 = vpop.permute.xlu0 %305
          %308 = vst.msk [vmem:[#allocation3] sm:$0xf] %vm300, %v306
          %309 = vrot.lane.b32.xlu0 %v304, 64
          %v310 = vpop.permute.xlu0 %309
          %312 = vst.msk [vmem:[#allocation4] sm:$0xf] %vm300, %v310
        $region44: #{tpu_custom_call.1} parent=31 // pred_fallthru
          _
        %s313 = smul.u32 %s27, 8
        %s314 = smul.u32 %s28, 8
        %s315 = sshra.s32 %s313, 3
        %s316 = sand.u32 %s313, 7
        %s317 = smul.addr %s315, 4
        %s318 = scalar_lea.vmem [#allocation2], %s317
        %v319 = vld [vmem:[%s318] sm:$0xf]
        %s320 = sshra.s32 %s314, 3
        %s321 = sand.u32 %s314, 7
        %s322 = smul.addr %s320, 4
        %s323 = scalar_lea.vmem [#allocation3], %s322
        %v324 = vld [vmem:[%s323] sm:$0xf]
        %s325 = smul.addr %s320, 4
        %s326 = scalar_lea.vmem [#allocation4], %s325
        %v327 = vld [vmem:[%s326] sm:$0xf]
        %vm328 = vcmask 261120
        %v330 = vsel %vm328, %v319, 0
        %v333 = vsel %vm328, %v324, 0
        %335 = vmatprep.subr.bf16.mxu0 0
        %336 = vmatpush1.bf16.xpose.msra.mxu0 %v333
        %337 = vmatprep.subr.bf16.mxu0 0
        %338 = vmatpush1.bf16.xpose.msra.mxu0 0
        %339 = vmatprep.subr.bf16.mxu0 0
        %340 = vmatpush1.bf16.xpose.msra.mxu0 0
        %341 = vmatprep.subr.bf16.mxu0 0
        %342 = vmatpush1.bf16.xpose.msra.mxu0 0
        %343 = vmatprep.subr.bf16.mxu0 0
        %344 = vmatpush1.bf16.xpose.msra.mxu0 0
        %345 = vmatprep.subr.bf16.mxu0 0
        %346 = vmatpush1.bf16.xpose.msra.mxu0 0
        %347 = vmatprep.subr.bf16.mxu0 0
        %348 = vmatpush1.bf16.xpose.msra.mxu0 0
        %349 = vmatprep.subr.bf16.mxu0 0
        %350 = vmatpush1.bf16.xpose.msra.mxu0 0
        %351 = vmatprep.subr.bf16.mxu0 0
        %352 = vmatpush1.bf16.xpose.msra.mxu0 0
        %353 = vmatprep.subr.bf16.mxu0 0
        %354 = vmatpush1.bf16.xpose.msra.mxu0 0
        %355 = vmatprep.subr.bf16.mxu0 0
        %356 = vmatpush1.bf16.xpose.msra.mxu0 0
        %357 = vmatprep.subr.bf16.mxu0 0
        %358 = vmatpush1.bf16.xpose.msra.mxu0 0
        %359 = vmatprep.subr.bf16.mxu0 0
        %360 = vmatpush1.bf16.xpose.msra.mxu0 0
        %361 = vmatprep.subr.bf16.mxu0 0
        %362 = vmatpush1.bf16.xpose.msra.mxu0 0
        %363 = vmatprep.subr.bf16.mxu0 0
        %364 = vmatpush1.bf16.xpose.msra.mxu0 0
        %365 = vmatprep.subr.bf16.mxu0 0
        %366 = vmatpush1.bf16.xpose.msra.mxu0 0
        %367 = vmatprep.mubr.bf16.mxu0 0
        %368 = vmatmul.mubr.bf16.gmra.mrb[0].mxu0 %v330
        %v369 = vpop.f32.mrb[0].mxu0
        %v370 = vadd.f32 0.0, %v369
        %v371 = vpop.f32.mrb[0].mxu0
        %v372 = vpop.f32.mrb[0].mxu0
        %v373 = vpop.f32.mrb[0].mxu0
        %374 = vdwg.mxu0
        %vm375 = vcmask 64512
        %v376 = vsel %vm375, %v370, -inf
        %377 = vmax.xlane.f32.xlu0 %v376
        %v378 = vpop.xlane.xlu0 %377
        %v379 = vsub.f32 %v370, %v378
        %v380 = vmul.f32 %v379, 1.442695
        %v381 = vpow.pop %v380
        %v382 = vsel %vm375, %v381, 0.0
        %383 = vadd.xlane.f32.xlu0 %v382
        %v384 = vpop.xlane.xlu0 %383
        %v385 = vpack.c.bf16 %v381, %v381
        %v387 = vsel %vm375, %v385, 0
        %vm389 = vcmask 1043456
        %v391 = vsel %vm389, %v327, 0
        %393 = vmatprep.subr.bf16.mxu0 0
        %394 = vmatpush1.bf16.msra.mxu0 %v391
        %395 = vmatprep.subr.bf16.mxu0 0
        %396 = vmatpush1.bf16.msra.mxu0 0
        %397 = vmatprep.subr.bf16.mxu0 0
        %398 = vmatpush1.bf16.msra.mxu0 0
        %399 = vmatprep.subr.bf16.mxu0 0
        %400 = vmatpush1.bf16.msra.mxu0 0
        %401 = vmatprep.subr.bf16.mxu0 0
        %402 = vmatpush1.bf16.msra.mxu0 0
        %403 = vmatprep.subr.bf16.mxu0 0
        %404 = vmatpush1.bf16.msra.mxu0 0
        %405 = vmatprep.subr.bf16.mxu0 0
        %406 = vmatpush1.bf16.msra.mxu0 0
        %407 = vmatprep.subr.bf16.mxu0 0
        %408 = vmatpush1.bf16.msra.mxu0 0
        %409 = vmatprep.subr.bf16.mxu0 0
        %410 = vmatpush1.bf16.msra.mxu0 0
        %411 = vmatprep.subr.bf16.mxu0 0
        %412 = vmatpush1.bf16.msra.mxu0 0
        %413 = vmatprep.subr.bf16.mxu0 0
        %414 = vmatpush1.bf16.msra.mxu0 0
        %415 = vmatprep.subr.bf16.mxu0 0
        %416 = vmatpush1.bf16.msra.mxu0 0
        %417 = vmatprep.subr.bf16.mxu0 0
        %418 = vmatpush1.bf16.msra.mxu0 0
        %419 = vmatprep.subr.bf16.mxu0 0
        %420 = vmatpush1.bf16.msra.mxu0 0
        %421 = vmatprep.subr.bf16.mxu0 0
        %422 = vmatpush1.bf16.msra.mxu0 0
        %423 = vmatprep.subr.bf16.mxu0 0
        %424 = vmatpush1.bf16.msra.mxu0 0
        %425 = vmatprep.mubr.bf16.mxu0 0
        %426 = vmatmul.mubr.bf16.gmra.mrb[0].mxu0 %v387
        %v427 = vpop.f32.mrb[0].mxu0
        %v428 = vadd.f32 0.0, %v427
        %v429 = vpop.f32.mrb[0].mxu0
        %v430 = vpop.f32.mrb[0].mxu0
        %v431 = vpop.f32.mrb[0].mxu0
        %432 = vdwg.mxu0
        %v433 = vrcp.pop %v384
        %v434 = vmul.f32 %v428, %v433
        %435 = vst.msk [vmem:[%s221] sm:$0xff] %vm328, %v434
        %s436 = sand.u32 %s118, 1
        %s437 = scalar_lea.sflag [#allocation10], %s436
        %s438 = sand.u32 %s118, 1
        %s439 = smul.addr %s438, 8
        %s440 = scalar_lea.vmem [#allocation13], %s439
        // Predicated region
        $region45: #{tpu_custom_call.1} parent=31 // pred_check
          %p441 = pneg %p128
        $region46: #{tpu_custom_call.1} parent=31 // pred_check_branch
          %443 = sbr.rel (%p441) target = $region48
        $region47: #{tpu_custom_call.1} parent=31 // pred_region
          %s445 = ssub.s32 128, 128
          %446 = vsyncadd %s437, %s445
          %s447 = sadd.s32 %s27, %s26
          %s448 = smul.addr %s447, 128
          %s449 = scalar_lea.hbm %s3, %s448
          %s451 = sshll.u32 %s440, 4
          %s452 = int_to_ptr.vmem [resolvable:$true] %s451
          %454 = dma.vmem_to_hbm [thread:$0]  %s452, 128, %s449, %s437
        $region48: #{tpu_custom_call.1} parent=31 // pred_fallthru
          _
      $region32: #{tpu_custom_call.1} parent=5 // pred_fallthru
        _
      %p455 = scmp.le.s32.totalorder 2, %s16
      // Predicated region
      $region49: #{tpu_custom_call.1} parent=5 // pred_check
        %p456 = pneg %p455
      $region50: #{tpu_custom_call.1} parent=5 // pred_check_branch
        %458 = sbr.rel (%p456) target = $region52
      $region51: #{tpu_custom_call.1} parent=5 // pred_region
        %s459 = ssub.s32 %s16, 2
        // Predicated region
        $region53: #{tpu_custom_call.1} parent=51 // pred_check
          %p460 = pneg %p134
        $region54: #{tpu_custom_call.1} parent=51 // pred_check_branch
          %462 = sbr.rel (%p460) target = $region56
        $region55: #{tpu_custom_call.1} parent=51 // pred_region
          %s463 = sand.u32 %s119, 1
          %s464 = scalar_lea.sflag [#allocation10], %s463
          %s465 = sand.u32 %s119, 1
          %s466 = smul.addr %s465, 8
          %s467 = scalar_lea.vmem [#allocation13], %s466
          %468 = dma.done %s464, 128
        $region56: #{tpu_custom_call.1} parent=51 // pred_fallthru
          _
      $region52: #{tpu_custom_call.1} parent=5 // pred_fallthru
        _
    $region6: #{tpu_custom_call.1} parent=1 // loop_footer
      %s20 = sadd.s32 1, %s16
    $region7: #{tpu_custom_call.1} parent=1 // loop_footer_branch
      %15 = sbr.rel target = $region3
    $region8: #{tpu_custom_call.1} parent=1 // loop_exit
      _
    %469 = vsyncpa [#allocation9], 1
    %s470 = scalar_lea.sflag [#allocation9], 1
    %471 = vsyncpa %s470, 1
    %472 = vsyncpa [#allocation12], 1
    %473 = vsyncpa [#allocation10], 1
    %s474 = scalar_lea.sflag [#allocation10], 1
    %475 = vsyncpa %s474, 1

</llo_original>
